<compile_context>
chip_gen: v7x
topology: tpu7x:2x2x1
jax: 0.10.0
libtpu: 0.0.40
codegen_flags: <defaults>
</compile_context>

<pallas_src>
import jax
import jax.numpy as jnp
from jax.experimental import pallas as pl
from jax.experimental.pallas import tpu as pltpu


# ----------------------------- kernels -----------------------------

def _lane_expand(x_ref, de):
    """MXU lane-expand: returns f32 (TB, Dc*E) with out[t, d*E + e] = x[t, d]."""
    _, dc = x_ref.shape
    e = de // dc
    d_ids = jax.lax.broadcasted_iota(jnp.int32, (dc, de), 0)
    c_ids = jax.lax.broadcasted_iota(jnp.int32, (dc, de), 1)
    lo = d_ids * e
    sel = ((c_ids >= lo) & (c_ids < lo + e)).astype(x_ref.dtype)  # 0/1 block-diagonal
    # HIGHEST precision so f32 inputs are not rounded to bf16 inside the MXU; the
    # expansion is then an (essentially exact) copy of x into lane-dense layout.
    return jnp.dot(x_ref[...], sel, preferred_element_type=jnp.float32,
                   precision=jax.lax.Precision.HIGHEST)


def _embed_kernel(x_ref, w_ref, o_ref):
    # x: (TB, Dc), w: (1, Dc*E) flattened per-dim weights, o: (TB, Dc*E) lane-dense.
    x_exp = _lane_expand(x_ref, w_ref.shape[-1])
    o_ref[...] = (x_exp * w_ref[...]).astype(o_ref.dtype)


def _embed_bias_kernel(x_ref, w_ref, b_ref, o_ref):
    # b: (1, Dc*E) flattened per-dim biases.
    x_exp = _lane_expand(x_ref, w_ref.shape[-1])
    o_ref[...] = (x_exp * w_ref[...] + b_ref[...]).astype(o_ref.dtype)


# ----------------------------- tiling policy -----------------------------

def _round_up(n, m):
    return ((n + m - 1) // m) * m


def _vmem_policy():
    """Generation-aware (tile budget, vmem_limit cap) in bytes."""
    phys = 64 << 20                               # conservative default (v7x per-TC VMEM)
    try:
        info = pltpu.get_tpu_info()
        cap = getattr(info, "vmem_capacity_bytes", None) or getattr(info, "vmem_bytes", None)
        if cap:
            phys = int(cap)
    except Exception:
        pass
    tile_budget = min((phys * 2) // 5, 56 << 20)  # ~25 MiB on v7x, ~51 MiB on v5e/v6e
    limit_cap = min((phys * 3) // 4, 96 << 20)    # 48 MiB on v7x, 96 MiB on v5e/v6e
    return tile_budget, limit_cap


def _pick_d_chunk(D, E, *, target_lanes=512, max_lanes=4096, max_chunk=256):
    """Divisor Dc of D so the (TB, Dc*E) output tile is lane-dense (Dc*E % 128 == 0)."""
    if D * E <= max_lanes:
        return D                                  # single chunk; full-dim blocks are exempt
    best_small = None
    for dc in range(1, min(D, max_chunk) + 1):
        if D % dc:
            continue
        lanes = dc * E
        if lanes % 128:
            continue
        if lanes >= target_lanes:
            return dc                             # smallest lane-dense chunk at/above target
        best_small = dc
    if best_small is not None:
        return best_small
    # TODO(synk): no lane-dense divisor exists (e.g. prime D with E not a multiple of 128);
    # fall back to a single full-D chunk (block == full dim is exempt from the 128 rule).
    return D


def _pick_batch_tile(B, step_row_bytes, out_row_bytes, budget_bytes,
                     *, min_steps=8, min_tile_bytes=2 << 20):
    """Batch-tile rows: as large as the VMEM budget allows, but capped so the batch grid
    axis has several steps (pipelining / dual-TC), while output tiles stay >= ~2 MiB."""
    if B <= 8:
        return B
    b_pad = _round_up(B, 8)
    tb_max = (budget_bytes // max(step_row_bytes, 1)) // 8 * 8
    tb_max = max(8, min(tb_max, b_pad))
    # Floor: keep each output tile multi-MiB so the ~0.35us/step grid overhead amortizes.
    tb_floor = _round_up(pl.cdiv(min_tile_bytes, max(out_row_bytes, 1)), 8)
    tb_floor = max(8, min(tb_max, tb_floor))
    # Cap: prefer >= min_steps batch steps (pipeline depth + v7x dual-TC sharding).
    tb_cap = _round_up(pl.cdiv(B, min_steps), 8)
    tb = min(tb_max, max(tb_floor, tb_cap))
    return B if tb >= B else tb


# ----------------------------- wrapper -----------------------------

def independent_linear_embedder(x, weights, bias=None, *, out_dtype=None,
                                batch_tile=None, d_chunk=None):
    """
    Args:
      x:       (B, D, 1) input, same as the PyTorch module.
      weights: (D, E) — row i is nn.Linear(1, E).weight (shape (E, 1)) squeezed.
      bias:    optional (D, E) — row i is bias_i.  None == bias=False (module default).
      out_dtype: optional narrower store dtype (e.g. bfloat16); the output writeback
                 dominates HBM traffic, so this ~halves wall time when allowed.
    Returns:
      (B, D * E), matching torch.cat([linear_i(x[:, i, :]) for i], dim=-1).
    """
    B, D, one = x.shape
    assert one == 1, "expected input of shape (batch, input_dim, 1)"
    Dw, E = weights.shape
    assert Dw == D
    DE = D * E
    out_dtype = jnp.dtype(x.dtype if out_dtype is None else out_dtype)
    has_bias = bias is not None

    budget, limit_cap = _vmem_policy()

    Dc = d_chunk if d_chunk is not None else _pick_d_chunk(D, E)
    assert D % Dc == 0, "d_chunk must divide input_dim"
    nd = D // Dc
    DEc = Dc * E
    pad_DEc = _round_up(DEc, 128)
    pad_Dc = _round_up(Dc, 128)

    in_isize = jnp.dtype(x.dtype).itemsize
    w_isize = jnp.dtype(weights.dtype).itemsize
    out_isize = out_dtype.itemsize

    # Per-batch-row VMEM footprint of one grid step: double-buffered x/out tiles plus
    # the in-kernel f32 expansion temp (lane-padded).
    step_row = 2 * (pad_Dc * in_isize + pad_DEc * out_isize) + pad_DEc * 4
    out_row = DEc * out_isize
    tb = batch_tile if batch_tile is not None else _pick_batch_tile(B, step_row, out_row, budget)
    nb = pl.cdiv(B, tb)
    grid = (nb, nd)

    # Layout plumbing: all free bitcast reshapes, except the small (B*D-element) x transpose
    # into chunk-major order (trivial when nd == 1).
    x_chunks = jnp.transpose(jnp.reshape(x, (B, nd, Dc)), (1, 0, 2))   # (nd, B, Dc)
    w_rows = jnp.reshape(weights, (nd, 1, DEc))                        # (nd, 1, Dc*E)

    in_specs = [
        pl.BlockSpec((pl.Squeezed(), tb, Dc), lambda i, j: (j, i, 0)),
        pl.BlockSpec((pl.Squeezed(), 1, DEc), lambda i, j: (j, 0, 0)),
    ]
    args = [x_chunks, w_rows]
    kernel = _embed_kernel
    if has_bias:
        in_specs.append(pl.BlockSpec((pl.Squeezed(), 1, DEc), lambda i, j: (j, 0, 0)))
        args.append(jnp.reshape(bias, (nd, 1, DEc)))
        kernel = _embed_bias_kernel

    # VMEM accounting: double-buffered tiles (incl. 8-sublane-padded weight/bias rows),
    # in-kernel temps (f32 x_exp + iota/sel), plus headroom.  Clamped generation-aware.
    x_tile = tb * pad_Dc * in_isize
    o_tile = tb * pad_DEc * out_isize
    row_tiles = 8 * pad_DEc * w_isize * (2 if has_bias else 1)
    temps = (tb + 4 * Dc) * pad_DEc * 4
    vmem_needed = 2 * (x_tile + o_tile + row_tiles) + temps + (2 << 20)
    vmem_limit = int(min(limit_cap, max(vmem_needed, 16 << 20)))

    cost = pl.CostEstimate(
        flops=2 * B * D * DEc + 2 * B * DE,        # MXU lane-expand + VPU scale (+bias)
        transcendentals=0,
        bytes_accessed=(B * D * in_isize
                        + nb * DE * w_isize * (2 if has_bias else 1)
                        + B * DE * out_isize),
    )

    return pl.pallas_call(
        kernel,
        out_shape=jax.ShapeDtypeStruct((B, DE), out_dtype),
        grid=grid,
        in_specs=in_specs,
        out_specs=pl.BlockSpec((tb, DEc), lambda i, j: (i, j)),
        compiler_params=pltpu.CompilerParams(
            # Both axes write disjoint output blocks -> fully parallel; lets v7x shard
            # across its 2 TensorCores even when one axis collapses to a single step.
            dimension_semantics=("parallel", "parallel"),
            vmem_limit_bytes=vmem_limit,
        ),
        cost_estimate=cost,
    )(*args)


# ----------------------------- demo / check -----------------------------

if __name__ == "__main__":
    key = jax.random.PRNGKey(0)
    kx, kw, kb, kx2, kw2 = jax.random.split(key, 5)

    # Small shapes implied by the module forward: batch=2, input_dim=4, embed_dim=32.
    B, D, E = 2, 4, 32
    x = jax.random.normal(kx, (B, D, 1), dtype=jnp.float32)
    # nn.Linear(1, E) init is U(-1, 1) (kaiming uniform, fan_in=1); deterministic here.
    w = jax.random.uniform(kw, (D, E), jnp.float32, -1.0, 1.0)
    b = jax.random.uniform(kb, (D, E), jnp.float32, -1.0, 1.0)

    ref = (x[:, :, 0][:, :, None] * w[None, :, :]).reshape(B, D * E)
    out = jax.block_until_ready(independent_linear_embedder(x, w))        # bias=False default
    assert out.shape == (B, D * E)
    assert jnp.allclose(out, ref, atol=1e-5, rtol=1e-5)

    ref_b = (x[:, :, 0][:, :, None] * w[None, :, :] + b[None, :, :]).reshape(B, D * E)
    out_b = jax.block_until_ready(independent_linear_embedder(x, w, bias=b))
    assert jnp.allclose(out_b, ref_b, atol=1e-5, rtol=1e-5)

    # Second (still small) shape that exercises the input_dim-chunked grid path.
    B2, D2, E2 = 16, 64, 128
    x2 = jax.random.normal(kx2, (B2, D2, 1), dtype=jnp.float32)
    w2 = jax.random.uniform(kw2, (D2, E2), jnp.float32, -1.0, 1.0)
    ref2 = (x2[:, :, 0][:, :, None] * w2[None, :, :]).reshape(B2, D2 * E2)
    out2 = jax.block_until_ready(independent_linear_embedder(x2, w2))
    assert out2.shape == (B2, D2 * E2)
    assert jnp.allclose(out2, ref2, atol=1e-5, rtol=1e-5)

    print("KERNEL_OK")
</pallas_src>

<mosaic_0001>
module attributes {stable_mosaic.version = 11 : i64} {
  func.func @_embed_kernel(%arg0: i32, %arg1: i32, %arg2: memref<1x2x4xf32, #tpu.memory_space<vmem>>, %arg3: memref<1x1x128xf32, #tpu.memory_space<vmem>>, %arg4: memref<2x128xf32, #tpu.memory_space<vmem>>) attributes {dimension_semantics = [#tpu.dimension_semantics<parallel>, #tpu.dimension_semantics<parallel>], iteration_bounds = array<i64: 1, 1>, scalar_prefetch = 0 : i64, scratch_operands = 0 : i64, tpu.core_type = #tpu.core_type<tc>, window_params = [{transform_indices = @transform_0, window_bounds = array<i64: 1, 2, 4>}, {transform_indices = @transform_1, window_bounds = array<i64: 1, 1, 128>}, {transform_indices = @transform_2, window_bounds = array<i64: 2, 128>}]} {
    %0 = tpu.iota {dimensions = array<i32: 0>} : vector<4x128xi32>
    %1 = tpu.iota {dimensions = array<i32: 1>} : vector<4x128xi32>
    %c32_i32 = arith.constant 32 : i32
    %2 = vector.broadcast %c32_i32 : i32 to vector<4x128xi32>
    %3 = arith.muli %0, %2 : vector<4x128xi32>
    %4 = arith.cmpi sge, %1, %3 : vector<4x128xi32>
    %c32_i32_0 = arith.constant 32 : i32
    %5 = vector.broadcast %c32_i32_0 : i32 to vector<4x128xi32>
    %6 = arith.addi %3, %5 : vector<4x128xi32>
    %7 = arith.cmpi slt, %1, %6 : vector<4x128xi32>
    %8 = arith.andi %4, %7 : vector<4x128xi1>
    %9 = arith.extui %8 : vector<4x128xi1> to vector<4x128xi32>
    %10 = arith.sitofp %9 : vector<4x128xi32> to vector<4x128xf32>
    %c0 = arith.constant 0 : index
    %c0_1 = arith.constant 0 : index
    %c0_2 = arith.constant 0 : index
    %11 = vector.load %arg2[%c0, %c0_1, %c0_2] : memref<1x2x4xf32, #tpu.memory_space<vmem>>, vector<1x2x4xf32>
    %12 = vector.shape_cast %11 : vector<1x2x4xf32> to vector<2x4xf32>
    %cst = arith.constant dense<0.000000e+00> : vector<2x128xf32>
    %13 = tpu.matmul %12, %10, %cst {dimension_numbers = #tpu.dot_dimension_numbers<[1], [0], [0], [1], [0, 0, 1, 1], [], []>, precision = #tpu.contract_precision<fp32>} : vector<2x4xf32>, vector<4x128xf32>, vector<2x128xf32> -> vector<2x128xf32>
    %c0_3 = arith.constant 0 : index
    %c0_4 = arith.constant 0 : index
    %c0_5 = arith.constant 0 : index
    %14 = vector.load %arg3[%c0_3, %c0_4, %c0_5] : memref<1x1x128xf32, #tpu.memory_space<vmem>>, vector<1x1x128xf32>
    %15 = vector.shape_cast %14 : vector<1x1x128xf32> to vector<1x128xf32>
    %16 = vector.broadcast %15 : vector<1x128xf32> to vector<2x128xf32>
    %17 = arith.mulf %13, %16 : vector<2x128xf32>
    %c0_6 = arith.constant 0 : index
    %c0_7 = arith.constant 0 : index
    %18 = vector.load %arg4[%c0_6, %c0_7] : memref<2x128xf32, #tpu.memory_space<vmem>>, vector<2x128xf32>
    tpu.vector_store %arg4[%c0_6, %c0_7], %17 {strides = array<i32>} : memref<2x128xf32, #tpu.memory_space<vmem>>, vector<2x128xf32>,
    return
  }
  func.func @transform_0(%arg0: i32, %arg1: i32) -> (i32, i32, i32) {
    %c0_i32 = arith.constant 0 : i32
    %c0_i32_0 = arith.constant 0 : i32
    return %arg1, %arg0, %c0_i32 : i32, i32, i32
  }
  func.func @transform_1(%arg0: i32, %arg1: i32) -> (i32, i32, i32) {
    %c0_i32 = arith.constant 0 : i32
    %c0_i32_0 = arith.constant 0 : i32
    %c0_i32_1 = arith.constant 0 : i32
    return %arg1, %c0_i32, %c0_i32_0 : i32, i32, i32
  }
  func.func @transform_2(%arg0: i32, %arg1: i32) -> (i32, i32) {
    %c0_i32 = arith.constant 0 : i32
    return %arg0, %arg1 : i32, i32
  }
}

</mosaic_0001>

<llo_original>
// kernel: tpu_custom_call.1
$region0: #{tpu_custom_call.1}
  #allocation0 [shape = 'u32[]', space=smem, size = 0x4, offset = 0x4, fixed_abs, tag = 'smem constant byte address 0x4 - core index']
  #allocation1 [shape = 'u32[144,128]{1,0:T(1,128)}', space=vmem, size = 0x12000, scoped, tag = 'internal scratch']
  %s0 = inlined_call_operand.hbm [shape: f32[1,2,4], index: 0, kind: input, shape index: {}]
  %s1 = inlined_call_operand.vmem [shape: f32[1,1,128], index: 1, kind: input, shape index: {}]
  %s2 = inlined_call_operand.hbm [shape: f32[2,128], index: 2, kind: output, shape index: {}]
  %s3 = sld [smem:[#allocation0]]
  $region22: #{tpu_custom_call.1} parent=0
    _
  %s5 = ssub.s32 1, %s3
  %s6 = scalar_select 0, %s5, %s3
  $region1: #{tpu_custom_call.1} parent=0
    #allocation2 [shape = 'u8[1024]{0}', space=vmem, size = 0x400, scoped, tag = 'input window, operand 0, single buffered']
    #allocation3 [shape = 's32[1]{0}', space=sflag, size = 0x4, scoped, tag = 'scoped memory for tpu_custom_call.1']
    #allocation4 [shape = 's32[1]{0}', space=sflag, size = 0x4, scoped, tag = 'scoped memory for tpu_custom_call.1']
    #allocation5 [shape = 'u8[1024]{0}', space=vmem, size = 0x400, scoped, tag = 'output window, operand 0, single buffered']
    %7 = vsyncpa [#allocation3], 0
    %8 = vsyncpa [#allocation4], 0
    // Predicated region
    $region2: #{tpu_custom_call.1} parent=1 // pred_check
      _
    $region3: #{tpu_custom_call.1} parent=1 // pred_check_branch
      %10 = sbr.rel (0) target = $region5
    $region4: #{tpu_custom_call.1} parent=1 // pred_region
      %s12 = ssub.s32 32, 32
      %13 = vsyncadd [#allocation3], %s12
      %s15 = sshll.u32 [#allocation2], 4
      %s16 = int_to_ptr.vmem [resolvable:$true] %s15
      %18 = dma.hbm_to_vmem [thread:$0]  %s0, 32, %s16, [#allocation3]
    $region5: #{tpu_custom_call.1} parent=1 // pred_fallthru
      _
    // Predicated region
    $region6: #{tpu_custom_call.1} parent=1 // pred_check
      _
    $region7: #{tpu_custom_call.1} parent=1 // pred_check_branch
      %20 = sbr.rel (0) target = $region9
    $region8: #{tpu_custom_call.1} parent=1 // pred_region
      _
    $region9: #{tpu_custom_call.1} parent=1 // pred_fallthru
      _
    // Predicated region
    $region10: #{tpu_custom_call.1} parent=1 // pred_check
      _
    $region11: #{tpu_custom_call.1} parent=1 // pred_check_branch
      %22 = sbr.rel (0) target = $region13
    $region12: #{tpu_custom_call.1} parent=1 // pred_region
      %23 = dma.done [#allocation3], 32
    $region13: #{tpu_custom_call.1} parent=1 // pred_fallthru
      _
    %v24 = vlaneseq
    %v25 = vshrl.u32 %v24, 7
    %v26 = vlaneseq
    %v27 = vand.u32 %v26, 127
    %v28 = vmul.u32 %v25, 32
    %vm29 = vcmp.ge.s32.totalorder %v27, %v28
    %v30 = vadd.s32 %v28, 32
    %vm31 = vcmp.lt.s32.totalorder %v27, %v30
    %vm32 = vmand %vm29, %vm31
    %v33 = vsel %vm32, 1, 0
    %v34 = vcvt.s32.f32 %v33
    %v35 = vld [vmem:[#allocation2] sm:$0x3]
    %vm36 = vcmask 31744
    %v38 = vsel %vm36, %v35, 0
    %vm40 = vcmask 1043456
    %v42 = vsel %vm40, %v34, 0
    %44 = vmatprep.subr.mxu0 0.0
    %v45 = vand.u32 %v42, 4294901760
    %46 = vmatpush1.msra.mxu0 %v45
    %47 = vmatprep.subr.mxu0 0.0
    %48 = vmatpush1.msra.mxu0 0.0
    %49 = vmatprep.subr.mxu0 0.0
    %50 = vmatpush1.msra.mxu0 0.0
    %51 = vmatprep.subr.mxu0 0.0
    %52 = vmatpush1.msra.mxu0 0.0
    %53 = vmatprep.subr.mxu0 0.0
    %54 = vmatpush1.msra.mxu0 0.0
    %55 = vmatprep.subr.mxu0 0.0
    %56 = vmatpush1.msra.mxu0 0.0
    %57 = vmatprep.subr.mxu0 0.0
    %58 = vmatpush1.msra.mxu0 0.0
    %59 = vmatprep.subr.mxu0 0.0
    %60 = vmatpush1.msra.mxu0 0.0
    %61 = vmatprep.subr.mxu0 0.0
    %62 = vmatpush1.msra.mxu0 0.0
    %63 = vmatprep.subr.mxu0 0.0
    %64 = vmatpush1.msra.mxu0 0.0
    %65 = vmatprep.subr.mxu0 0.0
    %66 = vmatpush1.msra.mxu0 0.0
    %67 = vmatprep.subr.mxu0 0.0
    %68 = vmatpush1.msra.mxu0 0.0
    %69 = vmatprep.subr.mxu0 0.0
    %70 = vmatpush1.msra.mxu0 0.0
    %71 = vmatprep.subr.mxu0 0.0
    %72 = vmatpush1.msra.mxu0 0.0
    %73 = vmatprep.subr.mxu0 0.0
    %74 = vmatpush1.msra.mxu0 0.0
    %75 = vmatprep.subr.mxu0 0.0
    %76 = vmatpush1.msra.mxu0 0.0
    %77 = vmatprep.subr.mxu0 0.0
    %78 = vmatpush1.msra.mxu0 0.0
    %79 = vmatprep.subr.mxu0 0.0
    %80 = vmatpush1.msra.mxu0 0.0
    %81 = vmatprep.subr.mxu0 0.0
    %82 = vmatpush1.msra.mxu0 0.0
    %83 = vmatprep.subr.mxu0 0.0
    %84 = vmatpush1.msra.mxu0 0.0
    %85 = vmatprep.subr.mxu0 0.0
    %86 = vmatpush1.msra.mxu0 0.0
    %87 = vmatprep.subr.mxu0 0.0
    %88 = vmatpush1.msra.mxu0 0.0
    %89 = vmatprep.subr.mxu0 0.0
    %90 = vmatpush1.msra.mxu0 0.0
    %91 = vmatprep.subr.mxu0 0.0
    %92 = vmatpush1.msra.mxu0 0.0
    %93 = vmatprep.subr.mxu0 0.0
    %94 = vmatpush1.msra.mxu0 0.0
    %95 = vmatprep.subr.mxu0 0.0
    %96 = vmatpush1.msra.mxu0 0.0
    %97 = vmatprep.subr.mxu0 0.0
    %98 = vmatpush1.msra.mxu0 0.0
    %99 = vmatprep.subr.mxu0 0.0
    %100 = vmatpush1.msra.mxu0 0.0
    %101 = vmatprep.subr.mxu0 0.0
    %102 = vmatpush1.msra.mxu0 0.0
    %103 = vmatprep.subr.mxu0 0.0
    %104 = vmatpush1.msra.mxu0 0.0
    %105 = vmatprep.subr.mxu0 0.0
    %106 = vmatpush1.msra.mxu0 0.0
    %107 = vmatprep.subr.mxu0 0.0
    %108 = vmatpush1.msra.mxu0 0.0
    %109 = vmatprep.mubr.f32.mxu0 0.0
    %v110 = vand.u32 %v38, 4294901760
    %v111 = vsub.f32 %v38, %v110
    %v112 = vand.u32 %v111, 4294901760
    %v113 = vsub.f32 %v111, %v112
    %v114 = vand.u32 %v113, 4294901760
    %115 = vmatmul.mubr.f32.gmra.mrb[0].mxu0 %v114
    %v116 = vpop.f32.mrb[0].mxu0
    %v117 = vadd.f32 0.0, %v116
    %v118 = vpop.f32.mrb[0].mxu0
    %119 = vdwg.mxu0
    %120 = vmatprep.subr.mxu0 0.0
    %v121 = vand.u32 %v42, 4294901760
    %v122 = vsub.f32 %v42, %v121
    %v123 = vand.u32 %v122, 4294901760
    %v124 = vsub.f32 %v122, %v123
    %v125 = vand.u32 %v124, 4294901760
    %126 = vmatpush1.msra.mxu0 %v125
    %127 = vmatprep.subr.mxu0 0.0
    %128 = vmatpush1.msra.mxu0 0.0
    %129 = vmatprep.subr.mxu0 0.0
    %130 = vmatpush1.msra.mxu0 0.0
    %131 = vmatprep.subr.mxu0 0.0
    %132 = vmatpush1.msra.mxu0 0.0
    %133 = vmatprep.subr.mxu0 0.0
    %134 = vmatpush1.msra.mxu0 0.0
    %135 = vmatprep.subr.mxu0 0.0
    %136 = vmatpush1.msra.mxu0 0.0
    %137 = vmatprep.subr.mxu0 0.0
    %138 = vmatpush1.msra.mxu0 0.0
    %139 = vmatprep.subr.mxu0 0.0
    %140 = vmatpush1.msra.mxu0 0.0
    %141 = vmatprep.subr.mxu0 0.0
    %142 = vmatpush1.msra.mxu0 0.0
    %143 = vmatprep.subr.mxu0 0.0
    %144 = vmatpush1.msra.mxu0 0.0
    %145 = vmatprep.subr.mxu0 0.0
    %146 = vmatpush1.msra.mxu0 0.0
    %147 = vmatprep.subr.mxu0 0.0
    %148 = vmatpush1.msra.mxu0 0.0
    %149 = vmatprep.subr.mxu0 0.0
    %150 = vmatpush1.msra.mxu0 0.0
    %151 = vmatprep.subr.mxu0 0.0
    %152 = vmatpush1.msra.mxu0 0.0
    %153 = vmatprep.subr.mxu0 0.0
    %154 = vmatpush1.msra.mxu0 0.0
    %155 = vmatprep.subr.mxu0 0.0
    %156 = vmatpush1.msra.mxu0 0.0
    %157 = vmatprep.subr.mxu0 0.0
    %158 = vmatpush1.msra.mxu0 0.0
    %159 = vmatprep.subr.mxu0 0.0
    %160 = vmatpush1.msra.mxu0 0.0
    %161 = vmatprep.subr.mxu0 0.0
    %162 = vmatpush1.msra.mxu0 0.0
    %163 = vmatprep.subr.mxu0 0.0
    %164 = vmatpush1.msra.mxu0 0.0
    %165 = vmatprep.subr.mxu0 0.0
    %166 = vmatpush1.msra.mxu0 0.0
    %167 = vmatprep.subr.mxu0 0.0
    %168 = vmatpush1.msra.mxu0 0.0
    %169 = vmatprep.subr.mxu0 0.0
    %170 = vmatpush1.msra.mxu0 0.0
    %171 = vmatprep.subr.mxu0 0.0
    %172 = vmatpush1.msra.mxu0 0.0
    %173 = vmatprep.subr.mxu0 0.0
    %174 = vmatpush1.msra.mxu0 0.0
    %175 = vmatprep.subr.mxu0 0.0
    %176 = vmatpush1.msra.mxu0 0.0
    %177 = vmatprep.subr.mxu0 0.0
    %178 = vmatpush1.msra.mxu0 0.0
    %179 = vmatprep.subr.mxu0 0.0
    %180 = vmatpush1.msra.mxu0 0.0
    %181 = vmatprep.subr.mxu0 0.0
    %182 = vmatpush1.msra.mxu0 0.0
    %183 = vmatprep.subr.mxu0 0.0
    %184 = vmatpush1.msra.mxu0 0.0
    %185 = vmatprep.subr.mxu0 0.0
    %186 = vmatpush1.msra.mxu0 0.0
    %187 = vmatprep.subr.mxu0 0.0
    %188 = vmatpush1.msra.mxu0 0.0
    %189 = vmatprep.mubr.f32.mxu0 0.0
    %v190 = vand.u32 %v38, 4294901760
    %191 = vmatmul.mubr.f32.gmra.mrb[0].mxu0 %v190
    %v192 = vpop.f32.mrb[0].mxu0
    %v193 = vadd.f32 %v117, %v192
    %v194 = vpop.f32.mrb[0].mxu0
    %195 = vdwg.mxu0
    %196 = vmatprep.subr.mxu0 0.0
    %v197 = vand.u32 %v42, 4294901760
    %v198 = vsub.f32 %v42, %v197
    %199 = vmatpush1.msra.mxu0 %v198
    %200 = vmatprep.subr.mxu0 0.0
    %201 = vmatpush1.msra.mxu0 0.0
    %202 = vmatprep.subr.mxu0 0.0
    %203 = vmatpush1.msra.mxu0 0.0
    %204 = vmatprep.subr.mxu0 0.0
    %205 = vmatpush1.msra.mxu0 0.0
    %206 = vmatprep.subr.mxu0 0.0
    %207 = vmatpush1.msra.mxu0 0.0
    %208 = vmatprep.subr.mxu0 0.0
    %209 = vmatpush1.msra.mxu0 0.0
    %210 = vmatprep.subr.mxu0 0.0
    %211 = vmatpush1.msra.mxu0 0.0
    %212 = vmatprep.subr.mxu0 0.0
    %213 = vmatpush1.msra.mxu0 0.0
    %214 = vmatprep.subr.mxu0 0.0
    %215 = vmatpush1.msra.mxu0 0.0
    %216 = vmatprep.subr.mxu0 0.0
    %217 = vmatpush1.msra.mxu0 0.0
    %218 = vmatprep.subr.mxu0 0.0
    %219 = vmatpush1.msra.mxu0 0.0
    %220 = vmatprep.subr.mxu0 0.0
    %221 = vmatpush1.msra.mxu0 0.0
    %222 = vmatprep.subr.mxu0 0.0
    %223 = vmatpush1.msra.mxu0 0.0
    %224 = vmatprep.subr.mxu0 0.0
    %225 = vmatpush1.msra.mxu0 0.0
    %226 = vmatprep.subr.mxu0 0.0
    %227 = vmatpush1.msra.mxu0 0.0
    %228 = vmatprep.subr.mxu0 0.0
    %229 = vmatpush1.msra.mxu0 0.0
    %230 = vmatprep.subr.mxu0 0.0
    %231 = vmatpush1.msra.mxu0 0.0
    %232 = vmatprep.subr.mxu0 0.0
    %233 = vmatpush1.msra.mxu0 0.0
    %234 = vmatprep.subr.mxu0 0.0
    %235 = vmatpush1.msra.mxu0 0.0
    %236 = vmatprep.subr.mxu0 0.0
    %237 = vmatpush1.msra.mxu0 0.0
    %238 = vmatprep.subr.mxu0 0.0
    %239 = vmatpush1.msra.mxu0 0.0
    %240 = vmatprep.subr.mxu0 0.0
    %241 = vmatpush1.msra.mxu0 0.0
    %242 = vmatprep.subr.mxu0 0.0
    %243 = vmatpush1.msra.mxu0 0.0
    %244 = vmatprep.subr.mxu0 0.0
    %245 = vmatpush1.msra.mxu0 0.0
    %246 = vmatprep.subr.mxu0 0.0
    %247 = vmatpush1.msra.mxu0 0.0
    %248 = vmatprep.subr.mxu0 0.0
    %249 = vmatpush1.msra.mxu0 0.0
    %250 = vmatprep.subr.mxu0 0.0
    %251 = vmatpush1.msra.mxu0 0.0
    %252 = vmatprep.subr.mxu0 0.0
    %253 = vmatpush1.msra.mxu0 0.0
    %254 = vmatprep.subr.mxu0 0.0
    %255 = vmatpush1.msra.mxu0 0.0
    %256 = vmatprep.subr.mxu0 0.0
    %257 = vmatpush1.msra.mxu0 0.0
    %258 = vmatprep.subr.mxu0 0.0
    %259 = vmatpush1.msra.mxu0 0.0
    %260 = vmatprep.subr.mxu0 0.0
    %261 = vmatpush1.msra.mxu0 0.0
    %262 = vmatprep.mubr.f32.mxu0 0.0
    %v263 = vand.u32 %v38, 4294901760
    %v264 = vsub.f32 %v38, %v263
    %265 = vmatmul.mubr.f32.gmra.mrb[0].mxu0 %v264
    %v266 = vpop.f32.mrb[0].mxu0
    %v267 = vadd.f32 %v193, %v266
    %v268 = vpop.f32.mrb[0].mxu0
    %269 = vdwg.mxu0
    %270 = vmatprep.subr.mxu0 0.0
    %v271 = vand.u32 %v42, 4294901760
    %272 = vmatpush1.msra.mxu0 %v271
    %273 = vmatprep.subr.mxu0 0.0
    %274 = vmatpush1.msra.mxu0 0.0
    %275 = vmatprep.subr.mxu0 0.0
    %276 = vmatpush1.msra.mxu0 0.0
    %277 = vmatprep.subr.mxu0 0.0
    %278 = vmatpush1.msra.mxu0 0.0
    %279 = vmatprep.subr.mxu0 0.0
    %280 = vmatpush1.msra.mxu0 0.0
    %281 = vmatprep.subr.mxu0 0.0
    %282 = vmatpush1.msra.mxu0 0.0
    %283 = vmatprep.subr.mxu0 0.0
    %284 = vmatpush1.msra.mxu0 0.0
    %285 = vmatprep.subr.mxu0 0.0
    %286 = vmatpush1.msra.mxu0 0.0
    %287 = vmatprep.subr.mxu0 0.0
    %288 = vmatpush1.msra.mxu0 0.0
    %289 = vmatprep.subr.mxu0 0.0
    %290 = vmatpush1.msra.mxu0 0.0
    %291 = vmatprep.subr.mxu0 0.0
    %292 = vmatpush1.msra.mxu0 0.0
    %293 = vmatprep.subr.mxu0 0.0
    %294 = vmatpush1.msra.mxu0 0.0
    %295 = vmatprep.subr.mxu0 0.0
    %296 = vmatpush1.msra.mxu0 0.0
    %297 = vmatprep.subr.mxu0 0.0
    %298 = vmatpush1.msra.mxu0 0.0
    %299 = vmatprep.subr.mxu0 0.0
    %300 = vmatpush1.msra.mxu0 0.0
    %301 = vmatprep.subr.mxu0 0.0
    %302 = vmatpush1.msra.mxu0 0.0
    %303 = vmatprep.subr.mxu0 0.0
    %304 = vmatpush1.msra.mxu0 0.0
    %305 = vmatprep.subr.mxu0 0.0
    %306 = vmatpush1.msra.mxu0 0.0
    %307 = vmatprep.subr.mxu0 0.0
    %308 = vmatpush1.msra.mxu0 0.0
    %309 = vmatprep.subr.mxu0 0.0
    %310 = vmatpush1.msra.mxu0 0.0
    %311 = vmatprep.subr.mxu0 0.0
    %312 = vmatpush1.msra.mxu0 0.0
    %313 = vmatprep.subr.mxu0 0.0
    %314 = vmatpush1.msra.mxu0 0.0
    %315 = vmatprep.subr.mxu0 0.0
    %316 = vmatpush1.msra.mxu0 0.0
    %317 = vmatprep.subr.mxu0 0.0
    %318 = vmatpush1.msra.mxu0 0.0
    %319 = vmatprep.subr.mxu0 0.0
    %320 = vmatpush1.msra.mxu0 0.0
    %321 = vmatprep.subr.mxu0 0.0
    %322 = vmatpush1.msra.mxu0 0.0
    %323 = vmatprep.subr.mxu0 0.0
    %324 = vmatpush1.msra.mxu0 0.0
    %325 = vmatprep.subr.mxu0 0.0
    %326 = vmatpush1.msra.mxu0 0.0
    %327 = vmatprep.subr.mxu0 0.0
    %328 = vmatpush1.msra.mxu0 0.0
    %329 = vmatprep.subr.mxu0 0.0
    %330 = vmatpush1.msra.mxu0 0.0
    %331 = vmatprep.subr.mxu0 0.0
    %332 = vmatpush1.msra.mxu0 0.0
    %333 = vmatprep.subr.mxu0 0.0
    %334 = vmatpush1.msra.mxu0 0.0
    %335 = vmatprep.mubr.f32.mxu0 0.0
    %v336 = vand.u32 %v38, 4294901760
    %v337 = vsub.f32 %v38, %v336
    %v338 = vand.u32 %v337, 4294901760
    %339 = vmatmul.mubr.f32.gmra.mrb[0].mxu0 %v338
    %v340 = vpop.f32.mrb[0].mxu0
    %v341 = vadd.f32 %v267, %v340
    %v342 = vpop.f32.mrb[0].mxu0
    %343 = vdwg.mxu0
    %344 = vmatprep.subr.mxu0 0.0
    %v345 = vand.u32 %v42, 4294901760
    %v346 = vsub.f32 %v42, %v345
    %v347 = vand.u32 %v346, 4294901760
    %348 = vmatpush1.msra.mxu0 %v347
    %349 = vmatprep.subr.mxu0 0.0
    %350 = vmatpush1.msra.mxu0 0.0
    %351 = vmatprep.subr.mxu0 0.0
    %352 = vmatpush1.msra.mxu0 0.0
    %353 = vmatprep.subr.mxu0 0.0
    %354 = vmatpush1.msra.mxu0 0.0
    %355 = vmatprep.subr.mxu0 0.0
    %356 = vmatpush1.msra.mxu0 0.0
    %357 = vmatprep.subr.mxu0 0.0
    %358 = vmatpush1.msra.mxu0 0.0
    %359 = vmatprep.subr.mxu0 0.0
    %360 = vmatpush1.msra.mxu0 0.0
    %361 = vmatprep.subr.mxu0 0.0
    %362 = vmatpush1.msra.mxu0 0.0
    %363 = vmatprep.subr.mxu0 0.0
    %364 = vmatpush1.msra.mxu0 0.0
    %365 = vmatprep.subr.mxu0 0.0
    %366 = vmatpush1.msra.mxu0 0.0
    %367 = vmatprep.subr.mxu0 0.0
    %368 = vmatpush1.msra.mxu0 0.0
    %369 = vmatprep.subr.mxu0 0.0
    %370 = vmatpush1.msra.mxu0 0.0
    %371 = vmatprep.subr.mxu0 0.0
    %372 = vmatpush1.msra.mxu0 0.0
    %373 = vmatprep.subr.mxu0 0.0
    %374 = vmatpush1.msra.mxu0 0.0
    %375 = vmatprep.subr.mxu0 0.0
    %376 = vmatpush1.msra.mxu0 0.0
    %377 = vmatprep.subr.mxu0 0.0
    %378 = vmatpush1.msra.mxu0 0.0
    %379 = vmatprep.subr.mxu0 0.0
    %380 = vmatpush1.msra.mxu0 0.0
    %381 = vmatprep.subr.mxu0 0.0
    %382 = vmatpush1.msra.mxu0 0.0
    %383 = vmatprep.subr.mxu0 0.0
    %384 = vmatpush1.msra.mxu0 0.0
    %385 = vmatprep.subr.mxu0 0.0
    %386 = vmatpush1.msra.mxu0 0.0
    %387 = vmatprep.subr.mxu0 0.0
    %388 = vmatpush1.msra.mxu0 0.0
    %389 = vmatprep.subr.mxu0 0.0
    %390 = vmatpush1.msra.mxu0 0.0
    %391 = vmatprep.subr.mxu0 0.0
    %392 = vmatpush1.msra.mxu0 0.0
    %393 = vmatprep.subr.mxu0 0.0
    %394 = vmatpush1.msra.mxu0 0.0
    %395 = vmatprep.subr.mxu0 0.0
    %396 = vmatpush1.msra.mxu0 0.0
    %397 = vmatprep.subr.mxu0 0.0
    %398 = vmatpush1.msra.mxu0 0.0
    %399 = vmatprep.subr.mxu0 0.0
    %400 = vmatpush1.msra.mxu0 0.0
    %401 = vmatprep.subr.mxu0 0.0
    %402 = vmatpush1.msra.mxu0 0.0
    %403 = vmatprep.subr.mxu0 0.0
    %404 = vmatpush1.msra.mxu0 0.0
    %405 = vmatprep.subr.mxu0 0.0
    %406 = vmatpush1.msra.mxu0 0.0
    %407 = vmatprep.subr.mxu0 0.0
    %408 = vmatpush1.msra.mxu0 0.0
    %409 = vmatprep.subr.mxu0 0.0
    %410 = vmatpush1.msra.mxu0 0.0
    %411 = vmatprep.mubr.f32.mxu0 0.0
    %v412 = vand.u32 %v38, 4294901760
    %413 = vmatmul.mubr.f32.gmra.mrb[0].mxu0 %v412
    %v414 = vpop.f32.mrb[0].mxu0
    %v415 = vadd.f32 %v341, %v414
    %v416 = vpop.f32.mrb[0].mxu0
    %417 = vdwg.mxu0
    %418 = vmatprep.subr.mxu0 0.0
    %v419 = vand.u32 %v42, 4294901760
    %420 = vmatpush1.msra.mxu0 %v419
    %421 = vmatprep.subr.mxu0 0.0
    %422 = vmatpush1.msra.mxu0 0.0
    %423 = vmatprep.subr.mxu0 0.0
    %424 = vmatpush1.msra.mxu0 0.0
    %425 = vmatprep.subr.mxu0 0.0
    %426 = vmatpush1.msra.mxu0 0.0
    %427 = vmatprep.subr.mxu0 0.0
    %428 = vmatpush1.msra.mxu0 0.0
    %429 = vmatprep.subr.mxu0 0.0
    %430 = vmatpush1.msra.mxu0 0.0
    %431 = vmatprep.subr.mxu0 0.0
    %432 = vmatpush1.msra.mxu0 0.0
    %433 = vmatprep.subr.mxu0 0.0
    %434 = vmatpush1.msra.mxu0 0.0
    %435 = vmatprep.subr.mxu0 0.0
    %436 = vmatpush1.msra.mxu0 0.0
    %437 = vmatprep.subr.mxu0 0.0
    %438 = vmatpush1.msra.mxu0 0.0
    %439 = vmatprep.subr.mxu0 0.0
    %440 = vmatpush1.msra.mxu0 0.0
    %441 = vmatprep.subr.mxu0 0.0
    %442 = vmatpush1.msra.mxu0 0.0
    %443 = vmatprep.subr.mxu0 0.0
    %444 = vmatpush1.msra.mxu0 0.0
    %445 = vmatprep.subr.mxu0 0.0
    %446 = vmatpush1.msra.mxu0 0.0
    %447 = vmatprep.subr.mxu0 0.0
    %448 = vmatpush1.msra.mxu0 0.0
    %449 = vmatprep.subr.mxu0 0.0
    %450 = vmatpush1.msra.mxu0 0.0
    %451 = vmatprep.subr.mxu0 0.0
    %452 = vmatpush1.msra.mxu0 0.0
    %453 = vmatprep.subr.mxu0 0.0
    %454 = vmatpush1.msra.mxu0 0.0
    %455 = vmatprep.subr.mxu0 0.0
    %456 = vmatpush1.msra.mxu0 0.0
    %457 = vmatprep.subr.mxu0 0.0
    %458 = vmatpush1.msra.mxu0 0.0
    %459 = vmatprep.subr.mxu0 0.0
    %460 = vmatpush1.msra.mxu0 0.0
    %461 = vmatprep.subr.mxu0 0.0
    %462 = vmatpush1.msra.mxu0 0.0
    %463 = vmatprep.subr.mxu0 0.0
    %464 = vmatpush1.msra.mxu0 0.0
    %465 = vmatprep.subr.mxu0 0.0
    %466 = vmatpush1.msra.mxu0 0.0
    %467 = vmatprep.subr.mxu0 0.0
    %468 = vmatpush1.msra.mxu0 0.0
    %469 = vmatprep.subr.mxu0 0.0
    %470 = vmatpush1.msra.mxu0 0.0
    %471 = vmatprep.subr.mxu0 0.0
    %472 = vmatpush1.msra.mxu0 0.0
    %473 = vmatprep.subr.mxu0 0.0
    %474 = vmatpush1.msra.mxu0 0.0
    %475 = vmatprep.subr.mxu0 0.0
    %476 = vmatpush1.msra.mxu0 0.0
    %477 = vmatprep.subr.mxu0 0.0
    %478 = vmatpush1.msra.mxu0 0.0
    %479 = vmatprep.subr.mxu0 0.0
    %480 = vmatpush1.msra.mxu0 0.0
    %481 = vmatprep.subr.mxu0 0.0
    %482 = vmatpush1.msra.mxu0 0.0
    %483 = vmatprep.mubr.f32.mxu0 0.0
    %v484 = vand.u32 %v38, 4294901760
    %485 = vmatmul.mubr.f32.gmra.mrb[0].mxu0 %v484
    %v486 = vpop.f32.mrb[0].mxu0
    %v487 = vadd.f32 %v415, %v486
    %v488 = vpop.f32.mrb[0].mxu0
    %489 = vdwg.mxu0
    %v490 = vld [vmem:[%s1] sm:$0x1]
    %v492 = vlaneseq
    %v493 = vshrl.u32 %v492, 7
    %v494 = vsub.s32 0, %v493
    %v495 = vrot.slane %v490, %v494
    %v497 = vmul.f32 %v487, %v495
    %498 = vst [vmem:[#allocation5] sm:$0x3] %v497
    // Predicated region
    $region14: #{tpu_custom_call.1} parent=1 // pred_check
      _
    $region15: #{tpu_custom_call.1} parent=1 // pred_check_branch
      %500 = sbr.rel (0) target = $region17
    $region16: #{tpu_custom_call.1} parent=1 // pred_region
      %s502 = ssub.s32 32, 32
      %503 = vsyncadd [#allocation4], %s502
      %s505 = sshll.u32 [#allocation5], 4
      %s506 = int_to_ptr.vmem [resolvable:$true] %s505
      %508 = dma.vmem_to_hbm [thread:$0]  %s506, 32, %s2, [#allocation4]
    $region17: #{tpu_custom_call.1} parent=1 // pred_fallthru
      _
    // Predicated region
    $region18: #{tpu_custom_call.1} parent=1 // pred_check
      _
    $region19: #{tpu_custom_call.1} parent=1 // pred_check_branch
      %510 = sbr.rel (0) target = $region21
    $region20: #{tpu_custom_call.1} parent=1 // pred_region
      %511 = dma.done [#allocation4], 32
    $region21: #{tpu_custom_call.1} parent=1 // pred_fallthru
      _
    %512 = vsyncpa [#allocation3], 1
    %513 = vsyncpa [#allocation4], 1

</llo_original>
